<compile_context>
chip_gen: v7x
topology: tpu7x:2x2x1
jax: 0.10.0
libtpu: 0.0.40
codegen_flags: <defaults>
</compile_context>

<pallas_src>
import functools

import jax
import jax.numpy as jnp
from jax.experimental import pallas as pl
from jax.experimental.pallas import tpu as pltpu

_LANE = 128


# ----------------------------- kernels --------------------------------------


def _masked_mean_kernel(x_ref, m_ref, cnt_ref, o_ref, acc_ref):
    """x_ref: (tb, ts, H), m_ref: (tb, ts, 1), cnt_ref: (tb, 1), o_ref: (tb, H)."""
    s = pl.program_id(1)

    @pl.when(s == 0)
    def _init():
        acc_ref[...] = jnp.zeros_like(acc_ref)

    x = x_ref[...]          # stays in input dtype (no full-tile f32 upcast)
    m = m_ref[...]          # (tb, ts, 1); 0/1 values are exact in x's dtype
    # Mask-multiply in the input dtype; accumulate the S-reduction in f32.
    acc_ref[...] += jnp.sum(x * m, axis=1, dtype=jnp.float32)      # (tb, H)

    @pl.when(s == pl.num_programs(1) - 1)
    def _finalize():
        denom = jnp.maximum(cnt_ref[...], 1e-9)    # torch.clamp(min=1e-9)
        inv = pl.reciprocal(denom, approx=False)   # exact; approx would be ~free on EUP
        o_ref[...] = (acc_ref[...] * inv).astype(o_ref.dtype)


def _plain_mean_kernel(x_ref, o_ref, acc_ref, *, inv_s):
    """torch.mean(last_hidden_state, 1) path (divides by the *real* S)."""
    s = pl.program_id(1)

    @pl.when(s == 0)
    def _init():
        acc_ref[...] = jnp.zeros_like(acc_ref)

    acc_ref[...] += jnp.sum(x_ref[...], axis=1, dtype=jnp.float32)

    @pl.when(s == pl.num_programs(1) - 1)
    def _finalize():
        o_ref[...] = (acc_ref[...] * inv_s).astype(o_ref.dtype)


# ----------------------------- helpers ---------------------------------------


def _round_up(x, m):
    return ((x + m - 1) // m) * m


def _sublane_align(itemsize):
    # f32 -> 8, bf16 -> 16, int8/fp8 -> 32 sublanes per packed vreg tile.
    return max(8, 32 // max(1, itemsize))


def _vmem_capacity_bytes():
    try:
        return int(pltpu.get_tpu_info().vmem_capacity_bytes)
    except Exception:
        return 64 * 1024 * 1024      # conservative default (v7x per-TC VMEM)


def _num_tensorcores():
    # v7x has 2 TensorCores per chip; v5e/v6e have 1.
    try:
        kind = jax.devices()[0].device_kind.lower()
        if "v7" in kind:
            return 2
    except Exception:
        pass
    return 1


def _choose_tiles(B, S, sub, row_bytes, budget, want_batch_tiles):
    """Pick (tb, ts) and the padded (B_pad, S_pad) they imply.

    `row_bytes` is the lane-padded VMEM footprint of one (b, s) row of all
    streamed inputs (x plus, if present, the 128-lane-padded mask), so
    tb * ts * row_bytes <= budget bounds one pipeline buffer.
    """
    max_rows = max(8 * sub, budget // max(1, row_bytes))
    s_cap = _round_up(S, sub)

    # Sequence tile first: bigger ts -> longer contiguous DMA runs and fewer
    # accumulator passes (single-TC guidance), capped by the row budget.
    ts = min(s_cap, max(sub, (max_rows // 8) // sub * sub))

    # Batch tile: fill the remaining row budget; on multi-TC chips cap it so
    # the batch grid axis keeps >= want_batch_tiles entries.
    if want_batch_tiles > 1:
        tb_cap = max(8, (B // want_batch_tiles) // 8 * 8)
    else:
        tb_cap = _round_up(B, 8)
    tb = min(tb_cap, max(8, (max_rows // ts) // 8 * 8))

    # Small, non-8-aligned batches: a single full-batch block avoids padding
    # (a full-extent block dim is exempt from the 8-sublane divisibility rule).
    if want_batch_tiles == 1 and B % 8 != 0 and B < tb and B * ts <= max_rows:
        tb = B

    B_pad = B if tb == B else _round_up(B, tb)
    S_pad = _round_up(S, ts)
    return tb, ts, B_pad, S_pad


# ----------------------------- wrapper ----------------------------------------


def mean_pooling(last_hidden_state, attention_mask=None):
    """Pallas equivalent of MeanPooling.forward."""
    B, S, H = last_hidden_state.shape
    dtype = last_hidden_state.dtype
    itemsize = jnp.dtype(dtype).itemsize
    sub = _sublane_align(itemsize)
    H_lanes = _round_up(H, _LANE)
    masked = attention_mask is not None

    vmem_cap = _vmem_capacity_bytes()
    budget = vmem_cap // 8          # one pipeline buffer of all streamed inputs

    # Lane-padded VMEM bytes of one (b, s) row of the streamed inputs: x pads
    # H to a multiple of 128 lanes; the (tb, ts, 1) mask block pads to 128.
    row_bytes = H_lanes * itemsize + (_LANE * itemsize if masked else 0)

    num_tc = _num_tensorcores()
    want_batch_tiles = num_tc if (num_tc > 1 and B >= 16) else 1

    tb, ts, B_pad, S_pad = _choose_tiles(B, S, sub, row_bytes, budget,
                                         want_batch_tiles)
    grid = (B_pad // tb, S_pad // ts)

    # --- VMEM accounting with padded block sizes (inputs/outputs x2 buffers) ---
    x_blk = tb * _round_up(ts, sub) * H_lanes * itemsize
    m_blk = tb * _round_up(ts, sub) * _LANE * itemsize if masked else 0
    cnt_blk = _round_up(tb, 8) * _LANE * 4 if masked else 0
    o_blk = _round_up(tb, sub) * H_lanes * itemsize
    acc_blk = _round_up(tb, 8) * H_lanes * 4
    needed = 2 * (x_blk + m_blk + cnt_blk) + 2 * o_blk + acc_blk
    vmem_limit = int(min(max(needed + (4 << 20), 16 << 20), (vmem_cap * 3) // 4))

    compiler_params = pltpu.CompilerParams(
        dimension_semantics=("parallel", "arbitrary"),   # batch parallel, S reduce
        vmem_limit_bytes=vmem_limit,
    )

    # Ragged shapes: zero-pad up to the tile grid.  Zero rows contribute
    # nothing to the sums and the denominator only sees the real tokens.
    x = last_hidden_state
    if B_pad != B or S_pad != S:
        x = jnp.pad(x, ((0, B_pad - B), (0, S_pad - S), (0, 0)))

    out_shape = jax.ShapeDtypeStruct((B_pad, H), dtype)

    if not masked:
        cost = pl.CostEstimate(
            flops=int(B_pad * S_pad * H),
            transcendentals=0,
            bytes_accessed=int(B_pad * S_pad * H * itemsize + B_pad * H * itemsize),
        )
        out = pl.pallas_call(
            functools.partial(_plain_mean_kernel, inv_s=1.0 / S),
            out_shape=out_shape,
            grid_spec=pltpu.PrefetchScalarGridSpec(
                num_scalar_prefetch=0,
                grid=grid,
                in_specs=[pl.BlockSpec((tb, ts, H), lambda b, s: (b, s, 0))],
                out_specs=pl.BlockSpec((tb, H), lambda b, s: (b, 0)),
                scratch_shapes=[pltpu.VMEM((tb, H), jnp.float32)],
            ),
            compiler_params=compiler_params,
            cost_estimate=cost,
        )(x)
        return out if B_pad == B else out[:B]

    # Masked path.  The mask keeps S on sublanes (same layout as x) so the
    # broadcast over H is a cheap lane splat; the per-batch token count is a
    # trivial O(B*S) reduction done once outside the kernel.
    cnt = jnp.sum(attention_mask.astype(jnp.float32), axis=1, keepdims=True)  # (B, 1)
    mask3 = attention_mask.reshape(B, S, 1).astype(dtype)
    if B_pad != B or S_pad != S:
        mask3 = jnp.pad(mask3, ((0, B_pad - B), (0, S_pad - S), (0, 0)))
        cnt = jnp.pad(cnt, ((0, B_pad - B), (0, 0)))

    cost = pl.CostEstimate(
        flops=int(2 * B_pad * S_pad * H),
        transcendentals=0,
        bytes_accessed=int(B_pad * S_pad * H * itemsize
                           + B_pad * S_pad * itemsize
                           + 2 * B_pad * H * itemsize),
    )
    out = pl.pallas_call(
        _masked_mean_kernel,
        out_shape=out_shape,
        grid_spec=pltpu.PrefetchScalarGridSpec(
            num_scalar_prefetch=0,
            grid=grid,
            in_specs=[
                pl.BlockSpec((tb, ts, H), lambda b, s: (b, s, 0)),
                pl.BlockSpec((tb, ts, 1), lambda b, s: (b, s, 0)),
                pl.BlockSpec((tb, 1), lambda b, s: (b, 0)),
            ],
            out_specs=pl.BlockSpec((tb, H), lambda b, s: (b, 0)),
            scratch_shapes=[pltpu.VMEM((tb, H), jnp.float32)],   # sum-of-embeddings
        ),
        compiler_params=compiler_params,
        cost_estimate=cost,
    )(x, mask3, cnt)
    return out if B_pad == B else out[:B]


# ----------------------------- test -------------------------------------------


if __name__ == "__main__":
    key = jax.random.PRNGKey(0)
    k1, k2, k3, k4 = jax.random.split(key, 4)

    # Small, tile-aligned shapes.
    B, S, H = 2, 8, 32
    last_hidden_state = jax.random.normal(k1, (B, S, H), dtype=jnp.float32)
    attention_mask = (jax.random.uniform(k2, (B, S)) > 0.3).astype(jnp.int32)

    out_masked = jax.block_until_ready(mean_pooling(last_hidden_state, attention_mask))
    out_plain = jax.block_until_ready(mean_pooling(last_hidden_state, None))

    m = attention_mask.astype(jnp.float32)[:, :, None]
    ref_masked = jnp.sum(last_hidden_state * m, axis=1) / jnp.maximum(
        jnp.sum(m, axis=1), 1e-9)
    ref_plain = jnp.mean(last_hidden_state, axis=1)

    assert out_masked.shape == (B, H)
    assert out_plain.shape == (B, H)
    assert jnp.allclose(out_masked, ref_masked, atol=1e-5)
    assert jnp.allclose(out_plain, ref_plain, atol=1e-5)

    # Ragged shapes (exercise the zero-pad / slice path).
    Br, Sr = 3, 13
    xr = jax.random.normal(k3, (Br, Sr, H), dtype=jnp.float32)
    mr = (jax.random.uniform(k4, (Br, Sr)) > 0.3).astype(jnp.int32)

    out_r_masked = jax.block_until_ready(mean_pooling(xr, mr))
    out_r_plain = jax.block_until_ready(mean_pooling(xr, None))

    mrf = mr.astype(jnp.float32)[:, :, None]
    ref_r_masked = jnp.sum(xr * mrf, axis=1) / jnp.maximum(jnp.sum(mrf, axis=1), 1e-9)
    ref_r_plain = jnp.mean(xr, axis=1)

    assert out_r_masked.shape == (Br, H)
    assert out_r_plain.shape == (Br, H)
    assert jnp.allclose(out_r_masked, ref_r_masked, atol=1e-5)
    assert jnp.allclose(out_r_plain, ref_r_plain, atol=1e-5)

    print("KERNEL_OK")
</pallas_src>

<mosaic_0001>
module attributes {stable_mosaic.version = 11 : i64} {
  func.func @_masked_mean_kernel(%arg0: i32, %arg1: i32, %arg2: memref<2x8x32xf32, #tpu.memory_space<vmem>>, %arg3: memref<2x8x1xf32, #tpu.memory_space<vmem>>, %arg4: memref<2x1xf32, #tpu.memory_space<vmem>>, %arg5: memref<2x32xf32, #tpu.memory_space<vmem>>, %arg6: memref<2x32xf32, #tpu.memory_space<vmem>>) attributes {dimension_semantics = [#tpu.dimension_semantics<parallel>, #tpu.dimension_semantics<arbitrary>], iteration_bounds = array<i64: 1, 1>, scalar_prefetch = 0 : i64, scratch_operands = 1 : i64, tpu.core_type = #tpu.core_type<tc>, window_params = [{transform_indices = @transform_0, window_bounds = array<i64: 2, 8, 32>}, {transform_indices = @transform_1, window_bounds = array<i64: 2, 8, 1>}, {transform_indices = @transform_2, window_bounds = array<i64: 2, 1>}, {transform_indices = @transform_3, window_bounds = array<i64: 2, 32>}]} {
    %c0_i32 = arith.constant 0 : i32
    %0 = arith.cmpi eq, %arg1, %c0_i32 : i32
    %1 = arith.extui %0 : i1 to i32
    %c0_i32_0 = arith.constant 0 : i32
    %2 = arith.cmpi ne, %1, %c0_i32_0 : i32
    scf.if %2 {
      %cst_12 = arith.constant 0.000000e+00 : f32
      %14 = vector.broadcast %cst_12 : f32 to vector<2x32xf32>
      %c0_13 = arith.constant 0 : index
      %c0_14 = arith.constant 0 : index
      %15 = vector.load %arg6[%c0_13, %c0_14] : memref<2x32xf32, #tpu.memory_space<vmem>>, vector<2x32xf32>
      tpu.vector_store %arg6[%c0_13, %c0_14], %14 {strides = array<i32>} : memref<2x32xf32, #tpu.memory_space<vmem>>, vector<2x32xf32>,
    } else {
    }
    %c0 = arith.constant 0 : index
    %c0_1 = arith.constant 0 : index
    %c0_2 = arith.constant 0 : index
    %3 = vector.load %arg2[%c0, %c0_1, %c0_2] : memref<2x8x32xf32, #tpu.memory_space<vmem>>, vector<2x8x32xf32>
    %c0_3 = arith.constant 0 : index
    %c0_4 = arith.constant 0 : index
    %c0_5 = arith.constant 0 : index
    %4 = vector.load %arg3[%c0_3, %c0_4, %c0_5] : memref<2x8x1xf32, #tpu.memory_space<vmem>>, vector<2x8x1xf32>
    %c0_6 = arith.constant 0 : index
    %c0_7 = arith.constant 0 : index
    %5 = vector.load %arg6[%c0_6, %c0_7] : memref<2x32xf32, #tpu.memory_space<vmem>>, vector<2x32xf32>
    %6 = vector.broadcast %4 : vector<2x8x1xf32> to vector<2x8x32xf32>
    %7 = arith.mulf %3, %6 : vector<2x8x32xf32>
    %cst = arith.constant dense<0.000000e+00> : vector<2x32xf32>
    %8 = vector.multi_reduction <add>, %7, %cst [1] : vector<2x8x32xf32> to vector<2x32xf32>
    %9 = arith.addf %5, %8 : vector<2x32xf32>
    %c0_8 = arith.constant 0 : index
    %c0_9 = arith.constant 0 : index
    %10 = vector.load %arg6[%c0_8, %c0_9] : memref<2x32xf32, #tpu.memory_space<vmem>>, vector<2x32xf32>
    tpu.vector_store %arg6[%c0_8, %c0_9], %9 {strides = array<i32>} : memref<2x32xf32, #tpu.memory_space<vmem>>, vector<2x32xf32>,
    %c0_i32_10 = arith.constant 0 : i32
    %11 = arith.cmpi eq, %arg1, %c0_i32_10 : i32
    %12 = arith.extui %11 : i1 to i32
    %c0_i32_11 = arith.constant 0 : i32
    %13 = arith.cmpi ne, %12, %c0_i32_11 : i32
    scf.if %13 {
      %c0_12 = arith.constant 0 : index
      %c0_13 = arith.constant 0 : index
      %14 = vector.load %arg4[%c0_12, %c0_13] : memref<2x1xf32, #tpu.memory_space<vmem>>, vector<2x1xf32>
      %cst_14 = arith.constant 9.99999971E-10 : f32
      %15 = vector.broadcast %cst_14 : f32 to vector<2x1xf32>
      %16 = arith.maximumf %14, %15 : vector<2x1xf32>
      %17 = tpu.reciprocal %16 : vector<2x1xf32> -> vector<2x1xf32>
      %c0_15 = arith.constant 0 : index
      %c0_16 = arith.constant 0 : index
      %18 = vector.load %arg6[%c0_15, %c0_16] : memref<2x32xf32, #tpu.memory_space<vmem>>, vector<2x32xf32>
      %19 = vector.broadcast %17 : vector<2x1xf32> to vector<2x32xf32>
      %20 = arith.mulf %18, %19 : vector<2x32xf32>
      %c0_17 = arith.constant 0 : index
      %c0_18 = arith.constant 0 : index
      %21 = vector.load %arg5[%c0_17, %c0_18] : memref<2x32xf32, #tpu.memory_space<vmem>>, vector<2x32xf32>
      tpu.vector_store %arg5[%c0_17, %c0_18], %20 {strides = array<i32>} : memref<2x32xf32, #tpu.memory_space<vmem>>, vector<2x32xf32>,
    } else {
    }
    return
  }
  func.func @transform_0(%arg0: i32, %arg1: i32) -> (i32, i32, i32) {
    %c0_i32 = arith.constant 0 : i32
    %c0_i32_0 = arith.constant 0 : i32
    return %arg0, %arg1, %c0_i32 : i32, i32, i32
  }
  func.func @transform_1(%arg0: i32, %arg1: i32) -> (i32, i32, i32) {
    %c0_i32 = arith.constant 0 : i32
    %c0_i32_0 = arith.constant 0 : i32
    return %arg0, %arg1, %c0_i32 : i32, i32, i32
  }
  func.func @transform_2(%arg0: i32, %arg1: i32) -> (i32, i32) {
    %c0_i32 = arith.constant 0 : i32
    %c0_i32_0 = arith.constant 0 : i32
    return %arg0, %c0_i32 : i32, i32
  }
  func.func @transform_3(%arg0: i32, %arg1: i32) -> (i32, i32) {
    %c0_i32 = arith.constant 0 : i32
    %c0_i32_0 = arith.constant 0 : i32
    return %arg0, %c0_i32 : i32, i32
  }
}

</mosaic_0001>

<llo_original>
// kernel: tpu_custom_call.1
$region0: #{tpu_custom_call.1}
  #allocation0 [shape = 'u32[]', space=smem, size = 0x4, offset = 0x4, fixed_abs, tag = 'smem constant byte address 0x4 - core index']
  #allocation1 [shape = 'u32[144,128]{1,0:T(1,128)}', space=vmem, size = 0x12000, scoped, tag = 'internal scratch']
  #allocation2 [shape = 'f32[2,32]{1,0:T(2,128)}', space=vmem, size = 0x400, scoped, tag = 'scratch operand']
  %s0 = inlined_call_operand.vmem [shape: f32[2,8,32], index: 0, kind: input, shape index: {}]
  %s1 = inlined_call_operand.vmem [shape: f32[2,8,1], index: 1, kind: input, shape index: {}]
  %s2 = inlined_call_operand.vmem [shape: f32[2,1], index: 2, kind: input, shape index: {}]
  %s3 = inlined_call_operand.hbm [shape: f32[2,32], index: 3, kind: output, shape index: {}]
  %s4 = sld [smem:[#allocation0]]
  $region30: #{tpu_custom_call.1} parent=0
    _
  %s6 = ssub.s32 1, %s4
  %s7 = scalar_select 0, %s6, %s4
  $region1: #{tpu_custom_call.1} parent=0
    #allocation3 [shape = 'u8[1024]{0}', space=vmem, size = 0x400, scoped, tag = 'output window, operand 0, single buffered']
    #allocation4 [shape = 's32[1]{0}', space=sflag, size = 0x4, scoped, tag = 'scoped memory for tpu_custom_call.1']
    %8 = vsyncpa [#allocation4], 0
    // Predicated region
    $region2: #{tpu_custom_call.1} parent=1 // pred_check
      _
    $region3: #{tpu_custom_call.1} parent=1 // pred_check_branch
      %10 = sbr.rel (0) target = $region5
    $region4: #{tpu_custom_call.1} parent=1 // pred_region
      _
    $region5: #{tpu_custom_call.1} parent=1 // pred_fallthru
      _
    // Predicated region
    $region6: #{tpu_custom_call.1} parent=1 // pred_check
      _
    $region7: #{tpu_custom_call.1} parent=1 // pred_check_branch
      %12 = sbr.rel (0) target = $region9
    $region8: #{tpu_custom_call.1} parent=1 // pred_region
      _
    $region9: #{tpu_custom_call.1} parent=1 // pred_fallthru
      _
    // Predicated region
    $region10: #{tpu_custom_call.1} parent=1 // pred_check
      _
    $region11: #{tpu_custom_call.1} parent=1 // pred_check_branch
      %14 = sbr.rel (0) target = $region13
    $region12: #{tpu_custom_call.1} parent=1 // pred_region
      _
    $region13: #{tpu_custom_call.1} parent=1 // pred_fallthru
      _
    %p15 = scmp.eq.s32.totalorder 0, 0
    // Predicated region
    $region14: #{tpu_custom_call.1} parent=1 // pred_check
      %p16 = pneg %p15
    $region15: #{tpu_custom_call.1} parent=1 // pred_check_branch
      %18 = sbr.rel (%p16) target = $region17
    $region16: #{tpu_custom_call.1} parent=1 // pred_region
      %vm19 = vcmask 254976
      %20 = vst.msk [vmem:[#allocation2] sm:$0x3] %vm19, 0.0
    $region17: #{tpu_custom_call.1} parent=1 // pred_fallthru
      _
    %v21 = vld [vmem:[%s0] sm:$0xff]
    %v22 = vld [vmem:[%s0 + $0x8] sm:$0xff]
    %v23 = vld [vmem:[%s1] sm:$0xff]
    %v24 = vld [vmem:[%s1 + $0x8] sm:$0xff]
    %v25 = vld [vmem:[#allocation2] sm:$0x3]
    %27 = vset.pattern.permute.xlu0 0
    %28 = vperm.xlu0 %27, %v23
    %v29 = vpop.permute.xlu0 %28
    %32 = vset.pattern.permute.xlu0 0
    %33 = vperm.xlu0 %32, %v24
    %v34 = vpop.permute.xlu0 %33
    %v36 = vmul.f32 %v21, %v29
    %v37 = vmul.f32 %v22, %v34
    %vm38 = vcmask 261120
    %v39 = vsel %vm38, %v36, 0.0
    %v40 = vrot.slane %v39, 4
    %v41 = vadd.f32 %v39, %v40
    %v42 = vrot.slane %v41, 2
    %v43 = vadd.f32 %v41, %v42
    %v44 = vrot.slane %v43, 1
    %v45 = vadd.f32 %v43, %v44
    %v46 = vsel %vm38, %v37, 0.0
    %v47 = vrot.slane %v46, 4
    %v48 = vadd.f32 %v46, %v47
    %v49 = vrot.slane %v48, 2
    %v50 = vadd.f32 %v48, %v49
    %v51 = vrot.slane %v50, 1
    %v52 = vadd.f32 %v50, %v51
    %vm55 = vcmask 1041409
    %v56 = vsel %vm55, %v52, %v45
    %v58 = vadd.f32 %v25, %v56
    %vm59 = vcmask 254976
    %60 = vst.msk [vmem:[#allocation2] sm:$0x3] %vm59, %v58
    // Predicated region
    $region18: #{tpu_custom_call.1} parent=1 // pred_check
      %p61 = pneg %p15
    $region19: #{tpu_custom_call.1} parent=1 // pred_check_branch
      %63 = sbr.rel (%p61) target = $region21
    $region20: #{tpu_custom_call.1} parent=1 // pred_region
      %v64 = vld [vmem:[%s2] sm:$0x3]
      %v65 = vmax.f32 %v64, 1e-09
      %v66 = vrcp.pop %v65
      %v67 = vld [vmem:[#allocation2] sm:$0x3]
      %69 = vset.pattern.permute.xlu0 0
      %70 = vperm.xlu0 %69, %v66
      %v71 = vpop.permute.xlu0 %70
      %v73 = vmul.f32 %v67, %v71
      %74 = vst.msk [vmem:[#allocation3] sm:$0x3] %vm59, %v73
    $region21: #{tpu_custom_call.1} parent=1 // pred_fallthru
      _
    // Predicated region
    $region22: #{tpu_custom_call.1} parent=1 // pred_check
      _
    $region23: #{tpu_custom_call.1} parent=1 // pred_check_branch
      %76 = sbr.rel (0) target = $region25
    $region24: #{tpu_custom_call.1} parent=1 // pred_region
      %s78 = ssub.s32 32, 32
      %79 = vsyncadd [#allocation4], %s78
      %s81 = sshll.u32 [#allocation3], 4
      %s82 = int_to_ptr.vmem [resolvable:$true] %s81
      %84 = dma.vmem_to_hbm [thread:$0]  %s82, 32, %s3, [#allocation4]
    $region25: #{tpu_custom_call.1} parent=1 // pred_fallthru
      _
    // Predicated region
    $region26: #{tpu_custom_call.1} parent=1 // pred_check
      _
    $region27: #{tpu_custom_call.1} parent=1 // pred_check_branch
      %86 = sbr.rel (0) target = $region29
    $region28: #{tpu_custom_call.1} parent=1 // pred_region
      %87 = dma.done [#allocation4], 32
    $region29: #{tpu_custom_call.1} parent=1 // pred_fallthru
      _
    %88 = vsyncpa [#allocation4], 1

</llo_original>
